<compile_context>
chip_gen: v7x
topology: tpu7x:2x2x1
jax: 0.10.0
libtpu: 0.0.40
codegen_flags: <defaults>
</compile_context>

<pallas_src>
import jax
import jax.numpy as jnp
from jax.experimental import pallas as pl
from jax.experimental.pallas import tpu as pltpu


# ---------------------------------------------------------------------------
# Kernel
# ---------------------------------------------------------------------------
def _finetune_kernel(x_ref, wenc_ref, benc_ref, wfc_ref, bfc_ref, out_ref, acc_ref):
    """Grid = (batch tiles, K tiles), K = seq*feat (mean-pool folded into w_enc).

    acc_ref accumulates the pre-activation encoder output in f32 across the K
    axis; the classifier head runs once per batch tile on the last K step.
    """
    k = pl.program_id(1)

    @pl.when(k == 0)
    def _init():
        acc_ref[...] = jnp.zeros_like(acc_ref)

    x = x_ref[...]
    if x.dtype != wenc_ref.dtype:      # static at trace time; no-op for f32 weights
        x = x.astype(wenc_ref.dtype)
    acc_ref[...] += jnp.dot(x, wenc_ref[...], preferred_element_type=jnp.float32)

    @pl.when(k == pl.num_programs(1) - 1)
    def _finalize():
        # encoder bias + ReLU (synthetic encoder.representation)
        h = jnp.maximum(acc_ref[...] + benc_ref[...], 0.0)
        # TODO(synk): training-mode dropout (p=0.5, Bernoulli mask + 1/(1-p) scale)
        # not implemented; nn.Dropout is the identity in eval mode, matched here.
        if h.dtype != wfc_ref.dtype:
            h = h.astype(wfc_ref.dtype)
        logits = jnp.dot(h, wfc_ref[...], preferred_element_type=jnp.float32)
        out_ref[...] = (logits + bfc_ref[...]).astype(out_ref.dtype)


# ---------------------------------------------------------------------------
# Host-side parameter folding
# ---------------------------------------------------------------------------
def _fold_params(params, seq_len, apply_bn, bn_eps, weights_dtype):
    """Fold mean-pool (1/S + seq stacking) into w_enc and eval-mode BN into (w_fc, b_fc)."""
    f32 = jnp.float32
    w_enc = params["w_enc"].astype(f32) * (1.0 / float(seq_len))        # (F, E)
    b_enc = params["b_enc"].astype(f32).reshape(1, -1)                   # (1, E)
    w_fc = params["w_fc"].astype(f32)                                    # (E, L)
    b_fc = params["b_fc"].astype(f32).reshape(1, -1)                     # (1, L)
    if apply_bn:
        # (h - mean) * scale @ W + b  ==  h @ (scale[:,None]*W) + (b - (mean*scale) @ W)
        scale = jax.lax.rsqrt(params["bn_var"].astype(f32).reshape(1, -1) + bn_eps)
        b_fc = b_fc - (params["bn_mean"].astype(f32).reshape(1, -1) * scale) @ w_fc
        w_fc = scale.reshape(-1, 1) * w_fc
    # Mean-pool fold: x.reshape(B, S*F) @ tile(w_enc/S, (S,1)) == mean_s(x) @ w_enc.
    w_enc_full = jnp.tile(w_enc, (seq_len, 1))                           # (S*F, E)
    if weights_dtype is not None:
        w_enc_full = w_enc_full.astype(weights_dtype)
        w_fc = w_fc.astype(weights_dtype)
    return w_enc_full, b_enc, w_fc, b_fc


# ---------------------------------------------------------------------------
# Padding-aware, generation-aware tile selection
# ---------------------------------------------------------------------------
def _roundup(n, m):
    return ((n + m - 1) // m) * m


def _sublane(itemsize):
    return {4: 8, 2: 16, 1: 32}.get(itemsize, 8)


def _padded_block_bytes(rows, cols, dtype):
    """VMEM footprint of one (rows, cols) block after (sublane, 128) tile padding."""
    it = jnp.dtype(dtype).itemsize
    return (_roundup(max(int(rows), 1), _sublane(it))
            * _roundup(max(int(cols), 1), 128) * it)


def _vmem_limit_bytes():
    """~75% of physical per-core VMEM; conservative 48 MiB fallback (fits v7x)."""
    cap = 64 * 1024 * 1024
    try:
        info = pltpu.get_tpu_info()
        c = int(getattr(info, "vmem_capacity_bytes", 0) or 0)
        if 16 * 1024 * 1024 <= c <= 256 * 1024 * 1024:
            cap = c
    except Exception:
        pass
    return (cap * 3) // 4


def _pick_tiles(B, K, E, L, x_dtype, w_dtype, vmem_limit):
    """Largest batch tile whose padded, double-buffered footprint fits the scoped
    VMEM limit; split K (128-aligned) only if even an 8-row batch tile won't fit."""
    budget = max(vmem_limit - 4 * 1024 * 1024, 4 * 1024 * 1024)   # compiler headroom

    def footprint(batch_tile, k_tile):
        return (
            2 * _padded_block_bytes(batch_tile, k_tile, x_dtype)      # x, double buffered
            + 2 * _padded_block_bytes(batch_tile, L, jnp.float32)     # out, double buffered
            + _padded_block_bytes(batch_tile, E, jnp.float32)         # acc scratch
            # resident params still get 2x pipeline buffers by default; budget them.
            + 2 * (_padded_block_bytes(k_tile, E, w_dtype)
                   + _padded_block_bytes(1, E, jnp.float32)
                   + _padded_block_bytes(E, L, w_dtype)
                   + _padded_block_bytes(1, L, jnp.float32)))

    min_bt = B if B <= 8 else 8

    k_tile = K
    if K > 128 and footprint(min_bt, K) > budget:
        k_tile = max(128, (_roundup(K, 128) // 2 // 128) * 128)
        while k_tile > 128 and footprint(min_bt, k_tile) > budget:
            k_tile = max(128, (k_tile // 2 // 128) * 128)

    if B <= 8:
        batch_tile = B                       # full-dim block: always legal
    else:
        # Keep >= 2 batch tiles so the "parallel" axis can shard across the
        # two TensorCores on v7x; cap where per-step amortization saturates.
        hi = min(_roundup(pl.cdiv(B, 2), 8), 2048)
        base = footprint(8, k_tile)
        step = footprint(16, k_tile) - base
        if step <= 0:
            batch_tile = hi
        elif base > budget:
            batch_tile = 8                   # best effort; k_tile already minimal
        else:
            batch_tile = min(hi, 8 + 8 * int((budget - base) // step))
        batch_tile = max(8, batch_tile)
    return int(batch_tile), int(k_tile)


# ---------------------------------------------------------------------------
# Public wrapper
# ---------------------------------------------------------------------------
def finetuning_classifier_forward(x, params, *, apply_bn=False, bn_eps=1e-6,
                                  weights_dtype=None, batch_tile=None, k_tile=None):
    """x: (batch, seq, feat) -> logits: (batch, num_labels) float32.

    weights_dtype=jnp.bfloat16 is recommended on v5e (bf16-native MXU); default
    keeps float32 MXU operands for bit-tight agreement with the f32 reference.
    """
    B, S, F = x.shape
    E, L = params["w_fc"].shape
    K = S * F

    w_enc_full, b_enc, w_fc, b_fc = _fold_params(params, S, apply_bn, bn_eps,
                                                 weights_dtype)

    # Lane-dense restructuring: (B, S, F) -> (B, S*F); the mean-pool lives in
    # w_enc_full, so the kernel is a pure 2-matmul pipeline on a dense x stream.
    x2d = x.reshape(B, K)

    vmem_limit = _vmem_limit_bytes()
    auto_bt, auto_kt = _pick_tiles(B, K, E, L, x2d.dtype, w_enc_full.dtype, vmem_limit)
    if batch_tile is None:
        batch_tile = auto_bt
    else:
        batch_tile = B if (batch_tile >= B or B <= 8) else max(8, (batch_tile // 8) * 8)
    if k_tile is None:
        k_tile = auto_kt
    else:
        k_tile = K if k_tile >= K else max(128, (k_tile // 128) * 128)

    # Pad K with zeros to a whole number of K tiles (zeros contribute nothing to
    # the accumulated dot, so results are exact and no garbage enters acc).
    if k_tile < K:
        K_pad = _roundup(K, k_tile)
        if K_pad != K:
            x2d = jnp.pad(x2d, ((0, 0), (0, K_pad - K)))
            w_enc_full = jnp.pad(w_enc_full, ((0, K_pad - K), (0, 0)))
    else:
        K_pad = K

    grid = (pl.cdiv(B, batch_tile), K_pad // k_tile)

    # Advisory cost estimate for the surrounding XLA graph.
    flops = 2 * B * K * E + 2 * B * E * L
    bytes_accessed = (x2d.size * x2d.dtype.itemsize
                      + sum(int(a.size) * a.dtype.itemsize
                            for a in (w_enc_full, b_enc, w_fc, b_fc))
                      + B * L * 4)
    cost = pl.CostEstimate(flops=int(flops), transcendentals=0,
                           bytes_accessed=int(bytes_accessed))

    resident = lambda i, k: (0, 0)   # weights/biases stay resident across the grid

    return pl.pallas_call(
        _finetune_kernel,
        out_shape=jax.ShapeDtypeStruct((B, L), jnp.float32),
        grid_spec=pltpu.PrefetchScalarGridSpec(
            num_scalar_prefetch=0,
            grid=grid,
            in_specs=[
                pl.BlockSpec((batch_tile, k_tile), lambda i, k: (i, k)),   # x stream
                pl.BlockSpec((k_tile, E), lambda i, k: (k, 0)),            # w_enc (pool folded)
                pl.BlockSpec((1, E), resident),                            # b_enc
                pl.BlockSpec((E, L), resident),                            # w_fc (BN folded)
                pl.BlockSpec((1, L), resident),                            # b_fc (BN folded)
            ],
            out_specs=pl.BlockSpec((batch_tile, L), lambda i, k: (i, 0)),
            scratch_shapes=[pltpu.VMEM((batch_tile, E), jnp.float32)],
        ),
        compiler_params=pltpu.CompilerParams(
            # batch tiles shard across TensorCores (v7x megacore); K is a reduction.
            dimension_semantics=("parallel", "arbitrary"),
            vmem_limit_bytes=int(vmem_limit),
        ),
        cost_estimate=cost,
    )(x2d, w_enc_full, b_enc, w_fc, b_fc)


# ---------------------------------------------------------------------------
# Pure-JAX reference (matches PyTorch eval semantics) and params
# ---------------------------------------------------------------------------
def _reference_forward(x, params, *, apply_bn=False, bn_eps=1e-6):
    pooled = jnp.mean(x.astype(jnp.float32), axis=1)
    h = jnp.maximum(pooled @ params["w_enc"] + params["b_enc"], 0.0)
    if apply_bn:
        h = (h - params["bn_mean"]) * jax.lax.rsqrt(params["bn_var"] + bn_eps)
    return h @ params["w_fc"] + params["b_fc"]


def init_params(key, feat_dim, encoder_dim, num_labels):
    k_we, k_be, k_wf, k_bf, k_bm, k_bv = jax.random.split(key, 6)
    return {
        # synthetic encoder projection
        "w_enc": jax.random.normal(k_we, (feat_dim, encoder_dim), jnp.float32) * 0.1,
        "b_enc": jax.random.normal(k_be, (1, encoder_dim), jnp.float32) * 0.1,
        # BatchNorm1d(affine=False) running stats (non-trivial so the BN fold is tested)
        "bn_mean": jax.random.normal(k_bm, (1, encoder_dim), jnp.float32) * 0.05,
        "bn_var": jnp.ones((1, encoder_dim), jnp.float32)
                  + jax.random.uniform(k_bv, (1, encoder_dim), jnp.float32) * 0.1,
        # nn.Linear(encoder_dim, num_labels), stored transposed: (encoder_dim, num_labels)
        "w_fc": jax.random.normal(k_wf, (encoder_dim, num_labels), jnp.float32) * 0.1,
        "b_fc": jax.random.normal(k_bf, (1, num_labels), jnp.float32) * 0.1,
    }


if __name__ == "__main__":
    # small shapes consistent with the module's 3-D input (bs, seq, feat)
    B, S, F = 2, 8, 32
    ENCODER_DIM, NUM_LABELS = 32, 10

    key = jax.random.PRNGKey(0)
    k_x, k_p = jax.random.split(key)
    x = jax.random.normal(k_x, (B, S, F), jnp.float32)
    params = init_params(k_p, F, ENCODER_DIM, NUM_LABELS)

    ok = True

    # 1) Default auto-tiled path, both BN settings (f32, tight tolerance).
    for apply_bn in (False, True):
        logits = finetuning_classifier_forward(x, params, apply_bn=apply_bn)
        jax.block_until_ready(logits)
        assert logits.shape == (B, NUM_LABELS)
        ref = _reference_forward(x, params, apply_bn=apply_bn)
        ok = ok and bool(jnp.allclose(logits, ref, rtol=1e-4, atol=1e-4))

    # 2) Multi-tile grid: partial batch tile + K-axis reduction with accumulator.
    B2 = 10
    x2 = jax.random.normal(jax.random.fold_in(k_x, 1), (B2, S, F), jnp.float32)
    logits2 = finetuning_classifier_forward(x2, params, apply_bn=True,
                                            batch_tile=8, k_tile=128)
    jax.block_until_ready(logits2)
    assert logits2.shape == (B2, NUM_LABELS)
    ref2 = _reference_forward(x2, params, apply_bn=True)
    ok = ok and bool(jnp.allclose(logits2, ref2, rtol=1e-4, atol=1e-4))

    # 3) bf16 MXU operands (recommended on v5e's bf16-native MXU); loose tolerance.
    logits3 = finetuning_classifier_forward(x, params, apply_bn=True,
                                            weights_dtype=jnp.bfloat16)
    jax.block_until_ready(logits3)
    ref3 = _reference_forward(x, params, apply_bn=True)
    ok = ok and bool(jnp.allclose(logits3, ref3, rtol=3e-2, atol=3e-2))

    if ok:
        print("KERNEL_OK")
</pallas_src>

<mosaic_0001>
module attributes {stable_mosaic.version = 11 : i64} {
  func.func @_finetune_kernel(%arg0: i32, %arg1: i32, %arg2: memref<2x256xf32, #tpu.memory_space<vmem>>, %arg3: memref<256x32xf32, #tpu.memory_space<vmem>>, %arg4: memref<1x32xf32, #tpu.memory_space<vmem>>, %arg5: memref<32x10xf32, #tpu.memory_space<vmem>>, %arg6: memref<1x10xf32, #tpu.memory_space<vmem>>, %arg7: memref<2x10xf32, #tpu.memory_space<vmem>>, %arg8: memref<2x32xf32, #tpu.memory_space<vmem>>) attributes {dimension_semantics = [#tpu.dimension_semantics<parallel>, #tpu.dimension_semantics<arbitrary>], iteration_bounds = array<i64: 1, 1>, scalar_prefetch = 0 : i64, scratch_operands = 1 : i64, tpu.core_type = #tpu.core_type<tc>, window_params = [{transform_indices = @transform_0, window_bounds = array<i64: 2, 256>}, {transform_indices = @transform_1, window_bounds = array<i64: 256, 32>}, {pipeline_mode = #tpu.pipeline_mode<synchronous>, transform_indices = @transform_2, window_bounds = array<i64: 1, 32>}, {pipeline_mode = #tpu.pipeline_mode<synchronous>, transform_indices = @transform_3, window_bounds = array<i64: 32, 10>}, {pipeline_mode = #tpu.pipeline_mode<synchronous>, transform_indices = @transform_4, window_bounds = array<i64: 1, 10>}, {transform_indices = @transform_5, window_bounds = array<i64: 2, 10>}]} {
    %c0_i32 = arith.constant 0 : i32
    %0 = arith.cmpi eq, %arg1, %c0_i32 : i32
    %1 = arith.extui %0 : i1 to i32
    %c0_i32_0 = arith.constant 0 : i32
    %2 = arith.cmpi ne, %1, %c0_i32_0 : i32
    scf.if %2 {
      %cst_10 = arith.constant 0.000000e+00 : f32
      %12 = vector.broadcast %cst_10 : f32 to vector<2x32xf32>
      %c0_11 = arith.constant 0 : index
      %c0_12 = arith.constant 0 : index
      %13 = vector.load %arg8[%c0_11, %c0_12] : memref<2x32xf32, #tpu.memory_space<vmem>>, vector<2x32xf32>
      tpu.vector_store %arg8[%c0_11, %c0_12], %12 {strides = array<i32>} : memref<2x32xf32, #tpu.memory_space<vmem>>, vector<2x32xf32>,
    } else {
    }
    %c0 = arith.constant 0 : index
    %c0_1 = arith.constant 0 : index
    %3 = vector.load %arg2[%c0, %c0_1] : memref<2x256xf32, #tpu.memory_space<vmem>>, vector<2x256xf32>
    %c0_2 = arith.constant 0 : index
    %c0_3 = arith.constant 0 : index
    %4 = vector.load %arg8[%c0_2, %c0_3] : memref<2x32xf32, #tpu.memory_space<vmem>>, vector<2x32xf32>
    %c0_4 = arith.constant 0 : index
    %c0_5 = arith.constant 0 : index
    %5 = vector.load %arg3[%c0_4, %c0_5] : memref<256x32xf32, #tpu.memory_space<vmem>>, vector<256x32xf32>
    %cst = arith.constant dense<0.000000e+00> : vector<2x32xf32>
    %6 = tpu.matmul %3, %5, %cst {dimension_numbers = #tpu.dot_dimension_numbers<[1], [0], [0], [1], [0, 0, 1, 1], [], []>} : vector<2x256xf32>, vector<256x32xf32>, vector<2x32xf32> -> vector<2x32xf32>
    %7 = arith.addf %4, %6 : vector<2x32xf32>
    %c0_6 = arith.constant 0 : index
    %c0_7 = arith.constant 0 : index
    %8 = vector.load %arg8[%c0_6, %c0_7] : memref<2x32xf32, #tpu.memory_space<vmem>>, vector<2x32xf32>
    tpu.vector_store %arg8[%c0_6, %c0_7], %7 {strides = array<i32>} : memref<2x32xf32, #tpu.memory_space<vmem>>, vector<2x32xf32>,
    %c0_i32_8 = arith.constant 0 : i32
    %9 = arith.cmpi eq, %arg1, %c0_i32_8 : i32
    %10 = arith.extui %9 : i1 to i32
    %c0_i32_9 = arith.constant 0 : i32
    %11 = arith.cmpi ne, %10, %c0_i32_9 : i32
    scf.if %11 {
      %c0_10 = arith.constant 0 : index
      %c0_11 = arith.constant 0 : index
      %12 = vector.load %arg8[%c0_10, %c0_11] : memref<2x32xf32, #tpu.memory_space<vmem>>, vector<2x32xf32>
      %c0_12 = arith.constant 0 : index
      %c0_13 = arith.constant 0 : index
      %13 = vector.load %arg4[%c0_12, %c0_13] : memref<1x32xf32, #tpu.memory_space<vmem>>, vector<1x32xf32>
      %14 = vector.broadcast %13 : vector<1x32xf32> to vector<2x32xf32>
      %15 = arith.addf %12, %14 : vector<2x32xf32>
      %cst_14 = arith.constant 0.000000e+00 : f32
      %16 = vector.broadcast %cst_14 : f32 to vector<2x32xf32>
      %17 = arith.maximumf %15, %16 : vector<2x32xf32>
      %c0_15 = arith.constant 0 : index
      %c0_16 = arith.constant 0 : index
      %18 = vector.load %arg5[%c0_15, %c0_16] : memref<32x10xf32, #tpu.memory_space<vmem>>, vector<32x10xf32>
      %cst_17 = arith.constant dense<0.000000e+00> : vector<2x10xf32>
      %19 = tpu.matmul %17, %18, %cst_17 {dimension_numbers = #tpu.dot_dimension_numbers<[1], [0], [0], [1], [0, 0, 1, 1], [], []>} : vector<2x32xf32>, vector<32x10xf32>, vector<2x10xf32> -> vector<2x10xf32>
      %c0_18 = arith.constant 0 : index
      %c0_19 = arith.constant 0 : index
      %20 = vector.load %arg6[%c0_18, %c0_19] : memref<1x10xf32, #tpu.memory_space<vmem>>, vector<1x10xf32>
      %21 = vector.broadcast %20 : vector<1x10xf32> to vector<2x10xf32>
      %22 = arith.addf %19, %21 : vector<2x10xf32>
      %c0_20 = arith.constant 0 : index
      %c0_21 = arith.constant 0 : index
      %23 = vector.load %arg7[%c0_20, %c0_21] : memref<2x10xf32, #tpu.memory_space<vmem>>, vector<2x10xf32>
      tpu.vector_store %arg7[%c0_20, %c0_21], %22 {strides = array<i32>} : memref<2x10xf32, #tpu.memory_space<vmem>>, vector<2x10xf32>,
    } else {
    }
    return
  }
  func.func @transform_0(%arg0: i32, %arg1: i32) -> (i32, i32) {
    %c0_i32 = arith.constant 0 : i32
    return %arg0, %arg1 : i32, i32
  }
  func.func @transform_1(%arg0: i32, %arg1: i32) -> (i32, i32) {
    %c0_i32 = arith.constant 0 : i32
    %c0_i32_0 = arith.constant 0 : i32
    return %arg1, %c0_i32 : i32, i32
  }
  func.func @transform_2(%arg0: i32, %arg1: i32) -> (i32, i32) {
    %c0_i32 = arith.constant 0 : i32
    %c0_i32_0 = arith.constant 0 : i32
    %c0_i32_1 = arith.constant 0 : i32
    return %c0_i32, %c0_i32_0 : i32, i32
  }
  func.func @transform_3(%arg0: i32, %arg1: i32) -> (i32, i32) {
    %c0_i32 = arith.constant 0 : i32
    %c0_i32_0 = arith.constant 0 : i32
    %c0_i32_1 = arith.constant 0 : i32
    return %c0_i32, %c0_i32_0 : i32, i32
  }
  func.func @transform_4(%arg0: i32, %arg1: i32) -> (i32, i32) {
    %c0_i32 = arith.constant 0 : i32
    %c0_i32_0 = arith.constant 0 : i32
    %c0_i32_1 = arith.constant 0 : i32
    return %c0_i32, %c0_i32_0 : i32, i32
  }
  func.func @transform_5(%arg0: i32, %arg1: i32) -> (i32, i32) {
    %c0_i32 = arith.constant 0 : i32
    %c0_i32_0 = arith.constant 0 : i32
    return %arg0, %c0_i32 : i32, i32
  }
}

</mosaic_0001>

<llo_original>
// kernel: tpu_custom_call.1
$region0: #{tpu_custom_call.1}
  #allocation0 [shape = 'u32[]', space=smem, size = 0x4, offset = 0x4, fixed_abs, tag = 'smem constant byte address 0x4 - core index']
  #allocation1 [shape = 'u32[144,128]{1,0:T(1,128)}', space=vmem, size = 0x12000, scoped, tag = 'internal scratch']
  #allocation2 [shape = 'f32[2,32]{1,0:T(2,128)}', space=vmem, size = 0x400, scoped, tag = 'scratch operand']
  %s0 = inlined_call_operand.vmem [shape: f32[2,256], index: 0, kind: input, shape index: {}]
  %s1 = inlined_call_operand.vmem [shape: f32[256,32], index: 1, kind: input, shape index: {}]
  %s2 = inlined_call_operand.vmem [shape: f32[1,32], index: 2, kind: input, shape index: {}]
  %s3 = inlined_call_operand.vmem [shape: f32[32,10], index: 3, kind: input, shape index: {}]
  %s4 = inlined_call_operand.vmem [shape: f32[1,10], index: 4, kind: input, shape index: {}]
  %s5 = inlined_call_operand.hbm [shape: f32[2,10], index: 5, kind: output, shape index: {}]
  %s6 = sld [smem:[#allocation0]]
  $region38: #{tpu_custom_call.1} parent=0
    _
  %s8 = ssub.s32 1, %s6
  %s9 = scalar_select 0, %s8, %s6
  $region1: #{tpu_custom_call.1} parent=0
    #allocation3 [shape = 'u8[1024]{0}', space=vmem, size = 0x400, scoped, tag = 'output window, operand 0, single buffered']
    #allocation4 [shape = 's32[1]{0}', space=sflag, size = 0x4, scoped, tag = 'scoped memory for tpu_custom_call.1']
    %10 = vsyncpa [#allocation4], 0
    // Predicated region
    $region2: #{tpu_custom_call.1} parent=1 // pred_check
      _
    $region3: #{tpu_custom_call.1} parent=1 // pred_check_branch
      %12 = sbr.rel (0) target = $region5
    $region4: #{tpu_custom_call.1} parent=1 // pred_region
      _
    $region5: #{tpu_custom_call.1} parent=1 // pred_fallthru
      _
    // Predicated region
    $region6: #{tpu_custom_call.1} parent=1 // pred_check
      _
    $region7: #{tpu_custom_call.1} parent=1 // pred_check_branch
      %14 = sbr.rel (0) target = $region9
    $region8: #{tpu_custom_call.1} parent=1 // pred_region
      _
    $region9: #{tpu_custom_call.1} parent=1 // pred_fallthru
      _
    // Predicated region
    $region10: #{tpu_custom_call.1} parent=1 // pred_check
      _
    $region11: #{tpu_custom_call.1} parent=1 // pred_check_branch
      %16 = sbr.rel (0) target = $region13
    $region12: #{tpu_custom_call.1} parent=1 // pred_region
      _
    $region13: #{tpu_custom_call.1} parent=1 // pred_fallthru
      _
    // Predicated region
    $region14: #{tpu_custom_call.1} parent=1 // pred_check
      _
    $region15: #{tpu_custom_call.1} parent=1 // pred_check_branch
      %18 = sbr.rel (0) target = $region17
    $region16: #{tpu_custom_call.1} parent=1 // pred_region
      _
    $region17: #{tpu_custom_call.1} parent=1 // pred_fallthru
      _
    // Predicated region
    $region18: #{tpu_custom_call.1} parent=1 // pred_check
      _
    $region19: #{tpu_custom_call.1} parent=1 // pred_check_branch
      %20 = sbr.rel (0) target = $region21
    $region20: #{tpu_custom_call.1} parent=1 // pred_region
      _
    $region21: #{tpu_custom_call.1} parent=1 // pred_fallthru
      _
    %p21 = scmp.eq.s32.totalorder 0, 0
    // Predicated region
    $region22: #{tpu_custom_call.1} parent=1 // pred_check
      %p22 = pneg %p21
    $region23: #{tpu_custom_call.1} parent=1 // pred_check_branch
      %24 = sbr.rel (%p22) target = $region25
    $region24: #{tpu_custom_call.1} parent=1 // pred_region
      %vm25 = vcmask 254976
      %26 = vst.msk [vmem:[#allocation2] sm:$0x3] %vm25, 0.0
    $region25: #{tpu_custom_call.1} parent=1 // pred_fallthru
      _
    %v27 = vld [vmem:[%s0] sm:$0xf]
    %v28 = vld [vmem:[#allocation2] sm:$0x3]
    %v29 = vld [vmem:[%s1] sm:$0xff]
    %v30 = vld [vmem:[%s1 + $0x8] sm:$0xff]
    %v31 = vld [vmem:[%s1 + $0x10] sm:$0xff]
    %v32 = vld [vmem:[%s1 + $0x18] sm:$0xff]
    %v33 = vld [vmem:[%s1 + $0x20] sm:$0xff]
    %v34 = vld [vmem:[%s1 + $0x28] sm:$0xff]
    %v35 = vld [vmem:[%s1 + $0x30] sm:$0xff]
    %v36 = vld [vmem:[%s1 + $0x38] sm:$0xff]
    %v37 = vld [vmem:[%s1 + $0x40] sm:$0xff]
    %v38 = vld [vmem:[%s1 + $0x48] sm:$0xff]
    %v39 = vld [vmem:[%s1 + $0x50] sm:$0xff]
    %v40 = vld [vmem:[%s1 + $0x58] sm:$0xff]
    %v41 = vld [vmem:[%s1 + $0x60] sm:$0xff]
    %v42 = vld [vmem:[%s1 + $0x68] sm:$0xff]
    %v43 = vld [vmem:[%s1 + $0x70] sm:$0xff]
    %v44 = vld [vmem:[%s1 + $0x78] sm:$0xff]
    %v45 = vld [vmem:[%s1 + $0x80] sm:$0xff]
    %v46 = vld [vmem:[%s1 + $0x88] sm:$0xff]
    %v47 = vld [vmem:[%s1 + $0x90] sm:$0xff]
    %v48 = vld [vmem:[%s1 + $0x98] sm:$0xff]
    %v49 = vld [vmem:[%s1 + $0xa0] sm:$0xff]
    %v50 = vld [vmem:[%s1 + $0xa8] sm:$0xff]
    %v51 = vld [vmem:[%s1 + $0xb0] sm:$0xff]
    %v52 = vld [vmem:[%s1 + $0xb8] sm:$0xff]
    %v53 = vld [vmem:[%s1 + $0xc0] sm:$0xff]
    %v54 = vld [vmem:[%s1 + $0xc8] sm:$0xff]
    %v55 = vld [vmem:[%s1 + $0xd0] sm:$0xff]
    %v56 = vld [vmem:[%s1 + $0xd8] sm:$0xff]
    %v57 = vld [vmem:[%s1 + $0xe0] sm:$0xff]
    %v58 = vld [vmem:[%s1 + $0xe8] sm:$0xff]
    %v59 = vld [vmem:[%s1 + $0xf0] sm:$0xff]
    %v60 = vld [vmem:[%s1 + $0xf8] sm:$0xff]
    %v63 = vunpack.c.l.s4 1983009808
    %v64 = vunpack.c.0.s8 %v63
    %v65 = vlaneseq
    %v66 = vshrl.u32 %v65, 7
    %v67 = vsub.s32 %v64, %v66
    %v68 = vrot.slane %v27, %v67
    %v69 = vcombine.high %v68, %v68
    %72 = vmatprep.subr.mxu0 0.0
    %73 = vmatpush1.msra.mxu0 %v29
    %74 = vmatprep.subr.mxu0 0.0
    %75 = vmatpush1.msra.mxu0 %v30
    %76 = vmatprep.subr.mxu0 0.0
    %77 = vmatpush1.msra.mxu0 %v31
    %78 = vmatprep.subr.mxu0 0.0
    %79 = vmatpush1.msra.mxu0 %v32
    %80 = vmatprep.subr.mxu0 0.0
    %81 = vmatpush1.msra.mxu0 %v33
    %82 = vmatprep.subr.mxu0 0.0
    %83 = vmatpush1.msra.mxu0 %v34
    %84 = vmatprep.subr.mxu0 0.0
    %85 = vmatpush1.msra.mxu0 %v35
    %86 = vmatprep.subr.mxu0 0.0
    %87 = vmatpush1.msra.mxu0 %v36
    %88 = vmatprep.subr.mxu0 0.0
    %89 = vmatpush1.msra.mxu0 %v37
    %90 = vmatprep.subr.mxu0 0.0
    %91 = vmatpush1.msra.mxu0 %v38
    %92 = vmatprep.subr.mxu0 0.0
    %93 = vmatpush1.msra.mxu0 %v39
    %94 = vmatprep.subr.mxu0 0.0
    %95 = vmatpush1.msra.mxu0 %v40
    %96 = vmatprep.subr.mxu0 0.0
    %97 = vmatpush1.msra.mxu0 %v41
    %98 = vmatprep.subr.mxu0 0.0
    %99 = vmatpush1.msra.mxu0 %v42
    %100 = vmatprep.subr.mxu0 0.0
    %101 = vmatpush1.msra.mxu0 %v43
    %102 = vmatprep.subr.mxu0 0.0
    %103 = vmatpush1.msra.mxu0 %v44
    %104 = vmatprep.subr.mxu0 0.0
    %105 = vmatpush1.msra.mxu0 %v45
    %106 = vmatprep.subr.mxu0 0.0
    %107 = vmatpush1.msra.mxu0 %v46
    %108 = vmatprep.subr.mxu0 0.0
    %109 = vmatpush1.msra.mxu0 %v47
    %110 = vmatprep.subr.mxu0 0.0
    %111 = vmatpush1.msra.mxu0 %v48
    %112 = vmatprep.subr.mxu0 0.0
    %113 = vmatpush1.msra.mxu0 %v49
    %114 = vmatprep.subr.mxu0 0.0
    %115 = vmatpush1.msra.mxu0 %v50
    %116 = vmatprep.subr.mxu0 0.0
    %117 = vmatpush1.msra.mxu0 %v51
    %118 = vmatprep.subr.mxu0 0.0
    %119 = vmatpush1.msra.mxu0 %v52
    %120 = vmatprep.subr.mxu0 0.0
    %121 = vmatpush1.msra.mxu0 %v53
    %122 = vmatprep.subr.mxu0 0.0
    %123 = vmatpush1.msra.mxu0 %v54
    %124 = vmatprep.subr.mxu0 0.0
    %125 = vmatpush1.msra.mxu0 %v55
    %126 = vmatprep.subr.mxu0 0.0
    %127 = vmatpush1.msra.mxu0 %v56
    %128 = vmatprep.subr.mxu0 0.0
    %129 = vmatpush1.msra.mxu0 %v57
    %130 = vmatprep.subr.mxu0 0.0
    %131 = vmatpush1.msra.mxu0 %v58
    %132 = vmatprep.subr.mxu0 0.0
    %133 = vmatpush1.msra.mxu0 %v59
    %134 = vmatprep.subr.mxu0 0.0
    %135 = vmatpush1.msra.mxu0 %v60
    %136 = vmatprep.mubr.f32.mxu0 %v69
    %137 = vmatmul.mubr.f32.gmra.mrb[0].mxu0 %v68
    %v138 = vpop.f32.mrb[0].mxu0
    %v139 = vadd.f32 0.0, %v138
    %v140 = vpop.f32.mrb[0].mxu0
    %141 = vdwg.mxu0
    %v142 = vadd.f32 %v28, %v139
    %vm143 = vcmask 254976
    %144 = vst.msk [vmem:[#allocation2] sm:$0x3] %vm143, %v142
    // Predicated region
    $region26: #{tpu_custom_call.1} parent=1 // pred_check
      %p145 = pneg %p21
    $region27: #{tpu_custom_call.1} parent=1 // pred_check_branch
      %147 = sbr.rel (%p145) target = $region29
    $region28: #{tpu_custom_call.1} parent=1 // pred_region
      %v148 = vld [vmem:[#allocation2] sm:$0x3]
      %v149 = vld [vmem:[%s2] sm:$0x1]
      %v151 = vlaneseq
      %v152 = vshrl.u32 %v151, 7
      %v153 = vsub.s32 0, %v152
      %v154 = vrot.slane %v149, %v153
      %v156 = vadd.f32 %v148, %v154
      %v157 = vmax.f32 %v156, 0.0
      %v158 = vld [vmem:[%s3] sm:$0xff]
      %v159 = vld [vmem:[%s3 + $0x8] sm:$0xff]
      %v160 = vld [vmem:[%s3 + $0x10] sm:$0xff]
      %v161 = vld [vmem:[%s3 + $0x18] sm:$0xff]
      %v162 = vld [vmem:[%s4] sm:$0x1]
      %v164 = vlaneseq
      %v165 = vshrl.u32 %v164, 7
      %v166 = vsub.s32 0, %v165
      %v167 = vrot.slane %v162, %v166
      %vm169 = vcmask 261120
      %v171 = vsel %vm169, %v157, 0
      %173 = vmatprep.subr.mxu0 0.0
      %174 = vmatpush1.msra.mxu0 %v158
      %175 = vmatprep.subr.mxu0 0.0
      %176 = vmatpush1.msra.mxu0 %v159
      %177 = vmatprep.subr.mxu0 0.0
      %178 = vmatpush1.msra.mxu0 %v160
      %179 = vmatprep.subr.mxu0 0.0
      %180 = vmatpush1.msra.mxu0 %v161
      %181 = vmatprep.subr.mxu0 0.0
      %182 = vmatpush1.msra.mxu0 0.0
      %183 = vmatprep.subr.mxu0 0.0
      %184 = vmatpush1.msra.mxu0 0.0
      %185 = vmatprep.subr.mxu0 0.0
      %186 = vmatpush1.msra.mxu0 0.0
      %187 = vmatprep.subr.mxu0 0.0
      %188 = vmatpush1.msra.mxu0 0.0
      %189 = vmatprep.subr.mxu0 0.0
      %190 = vmatpush1.msra.mxu0 0.0
      %191 = vmatprep.subr.mxu0 0.0
      %192 = vmatpush1.msra.mxu0 0.0
      %193 = vmatprep.subr.mxu0 0.0
      %194 = vmatpush1.msra.mxu0 0.0
      %195 = vmatprep.subr.mxu0 0.0
      %196 = vmatpush1.msra.mxu0 0.0
      %197 = vmatprep.subr.mxu0 0.0
      %198 = vmatpush1.msra.mxu0 0.0
      %199 = vmatprep.subr.mxu0 0.0
      %200 = vmatpush1.msra.mxu0 0.0
      %201 = vmatprep.subr.mxu0 0.0
      %202 = vmatpush1.msra.mxu0 0.0
      %203 = vmatprep.subr.mxu0 0.0
      %204 = vmatpush1.msra.mxu0 0.0
      %205 = vmatprep.subr.mxu0 0.0
      %206 = vmatpush1.msra.mxu0 0.0
      %207 = vmatprep.subr.mxu0 0.0
      %208 = vmatpush1.msra.mxu0 0.0
      %209 = vmatprep.subr.mxu0 0.0
      %210 = vmatpush1.msra.mxu0 0.0
      %211 = vmatprep.subr.mxu0 0.0
      %212 = vmatpush1.msra.mxu0 0.0
      %213 = vmatprep.subr.mxu0 0.0
      %214 = vmatpush1.msra.mxu0 0.0
      %215 = vmatprep.subr.mxu0 0.0
      %216 = vmatpush1.msra.mxu0 0.0
      %217 = vmatprep.subr.mxu0 0.0
      %218 = vmatpush1.msra.mxu0 0.0
      %219 = vmatprep.subr.mxu0 0.0
      %220 = vmatpush1.msra.mxu0 0.0
      %221 = vmatprep.subr.mxu0 0.0
      %222 = vmatpush1.msra.mxu0 0.0
      %223 = vmatprep.subr.mxu0 0.0
      %224 = vmatpush1.msra.mxu0 0.0
      %225 = vmatprep.subr.mxu0 0.0
      %226 = vmatpush1.msra.mxu0 0.0
      %227 = vmatprep.subr.mxu0 0.0
      %228 = vmatpush1.msra.mxu0 0.0
      %229 = vmatprep.subr.mxu0 0.0
      %230 = vmatpush1.msra.mxu0 0.0
      %231 = vmatprep.subr.mxu0 0.0
      %232 = vmatpush1.msra.mxu0 0.0
      %233 = vmatprep.subr.mxu0 0.0
      %234 = vmatpush1.msra.mxu0 0.0
      %235 = vmatprep.subr.mxu0 0.0
      %236 = vmatpush1.msra.mxu0 0.0
      %237 = vmatprep.mubr.f32.mxu0 0.0
      %238 = vmatmul.mubr.f32.gmra.mrb[0].mxu0 %v171
      %v239 = vpop.f32.mrb[0].mxu0
      %v240 = vadd.f32 %v167, %v239
      %v241 = vpop.f32.mrb[0].mxu0
      %242 = vdwg.mxu0
      %vm243 = vcmask 74752
      %244 = vst.msk [vmem:[#allocation3] sm:$0x3] %vm243, %v240
    $region29: #{tpu_custom_call.1} parent=1 // pred_fallthru
      _
    // Predicated region
    $region30: #{tpu_custom_call.1} parent=1 // pred_check
      _
    $region31: #{tpu_custom_call.1} parent=1 // pred_check_branch
      %246 = sbr.rel (0) target = $region33
    $region32: #{tpu_custom_call.1} parent=1 // pred_region
      %s248 = ssub.s32 32, 32
      %249 = vsyncadd [#allocation4], %s248
      %s251 = sshll.u32 [#allocation3], 4
      %s252 = int_to_ptr.vmem [resolvable:$true] %s251
      %254 = dma.vmem_to_hbm [thread:$0]  %s252, 32, %s5, [#allocation4]
    $region33: #{tpu_custom_call.1} parent=1 // pred_fallthru
      _
    // Predicated region
    $region34: #{tpu_custom_call.1} parent=1 // pred_check
      _
    $region35: #{tpu_custom_call.1} parent=1 // pred_check_branch
      %256 = sbr.rel (0) target = $region37
    $region36: #{tpu_custom_call.1} parent=1 // pred_region
      %257 = dma.done [#allocation4], 32
    $region37: #{tpu_custom_call.1} parent=1 // pred_fallthru
      _
    %258 = vsyncpa [#allocation4], 1

</llo_original>
